<compile_context>
chip_gen: v7x
topology: tpu7x:2x2x1
jax: 0.10.0
libtpu: 0.0.40
codegen_flags: <defaults>
</compile_context>

<pallas_src>
import functools

import jax
import jax.numpy as jnp
from jax.experimental import pallas as pl
from jax.experimental.pallas import tpu as pltpu


def _round_up(x, m):
    return (x + m - 1) // m * m


# ---------------------------------------------------------------------------
# Kernel
# ---------------------------------------------------------------------------
def _actor_kernel(state_ref, w_ref, b_ref, out_ref, *, S, S_r, COLS, A):
    """Fused 3-layer MLP (relu -> relu -> tanh) on one [TB, S] batch tile.

    w_ref (bf16, VMEM-resident across grid steps):
      rows [0        : S_r      )  W1 (S x COLS live, zero-padded)
      rows [S_r      : S_r+COLS )  W2 (COLS x COLS, zero-padded)
      rows [S_r+COLS : S_r+2C   )  W3 (COLS x COLS, zero-padded)
      (all offsets multiples of 16 -> bf16 (16,128) tile aligned)
    b_ref (f32): row 0 = b1, row 8 = b2, row 16 = b3 (each padded to COLS).
    """
    o_w2 = S_r
    o_w3 = S_r + COLS

    x = state_ref[...].astype(jnp.bfloat16)            # [TB, S]

    w1 = w_ref[0:S, :]                                  # [S, COLS]   bf16
    w2 = w_ref[o_w2:o_w2 + COLS, :]                     # [COLS, COLS] bf16
    w3 = w_ref[o_w3:o_w3 + COLS, :]                     # [COLS, COLS] bf16
    b1 = b_ref[0:1, :]                                  # [1, COLS] f32
    b2 = b_ref[8:9, :]
    b3 = b_ref[16:17, :]

    # fc1 + relu: bf16 MXU operands, f32 accumulate, f32 elementwise.
    h = jnp.dot(x, w1, preferred_element_type=jnp.float32)
    h = jnp.maximum(h + b1, 0.0)

    # fc2 + relu
    h = jnp.dot(h.astype(jnp.bfloat16), w2, preferred_element_type=jnp.float32)
    h = jnp.maximum(h + b2, 0.0)

    # fc3 + tanh; only the first A lanes are real -> narrow (masked) store,
    # which is far cheaper than writing a 128-wide f32 padded slab to HBM.
    h = jnp.dot(h.astype(jnp.bfloat16), w3, preferred_element_type=jnp.float32)
    y = jnp.tanh(h + b3)                                 # [TB, COLS] f32
    out_ref[...] = y[:, :A].astype(out_ref.dtype)        # [TB, A]


# ---------------------------------------------------------------------------
# Parameter packing (do this ONCE per parameter update, not per call)
# ---------------------------------------------------------------------------
def pack_actor_params(params):
    """Pack weights into one bf16 slab (16-row-aligned segments) and biases
    into a small f32 slab. Returns (w_slab, b_slab, meta)."""
    w1, b1 = params["w1"], params["b1"]      # [S, H], [1, H]
    w2, b2 = params["w2"], params["b2"]      # [H, H], [1, H]
    w3, b3 = params["w3"], params["b3"]      # [H, A], [1, A]

    S, H = w1.shape
    A = w3.shape[1]
    COLS = max(128, _round_up(H, 128), _round_up(A, 128))
    S_r = _round_up(max(S, 1), 16)           # bf16: segments 16-row aligned

    def pad_to(m, rows, cols, dtype):
        m = jnp.asarray(m, jnp.float32)
        m = m.reshape((1, -1)) if m.ndim == 1 else m
        out = jnp.zeros((rows, cols), jnp.float32)
        out = out.at[:m.shape[0], :m.shape[1]].set(m)
        return out.astype(dtype)

    w_slab = jnp.concatenate([
        pad_to(w1, S_r, COLS, jnp.bfloat16),
        pad_to(w2, COLS, COLS, jnp.bfloat16),
        pad_to(w3, COLS, COLS, jnp.bfloat16),
    ], axis=0)                                # [S_r + 2*COLS, COLS] bf16

    b_slab = jnp.concatenate([
        pad_to(b1, 8, COLS, jnp.float32),
        pad_to(b2, 8, COLS, jnp.float32),
        pad_to(b3, 8, COLS, jnp.float32),
    ], axis=0)                                # [24, COLS] f32

    meta = (S, S_r, COLS, A)
    return w_slab, b_slab, meta


# ---------------------------------------------------------------------------
# Wrapper
# ---------------------------------------------------------------------------
def actor_forward(state, w_slab, b_slab, meta, *, block_b=2048):
    """state: [B, state_dim] f32; (w_slab, b_slab, meta) from pack_actor_params.

    Returns [B, action_dim] f32 (tanh-squashed actions).
    """
    S, S_r, COLS, A = meta
    state = jnp.asarray(state, jnp.float32)
    B, S_in = state.shape
    assert S_in == S, "state feature dim does not match packed params"

    # Batch tile: whole batch when tiny; otherwise at least 2 grid steps so
    # ("parallel",) can shard across v7x's two TensorCores, with a large
    # 8-aligned tile (VMEM footprint at TB=2048 is only a few MiB).
    if B <= 8:
        TB = B
    else:
        TB = min(block_b, _round_up(-(-B // 2), 8))
    grid = (pl.cdiv(B, TB),)

    kernel = functools.partial(_actor_kernel, S=S, S_r=S_r, COLS=COLS, A=A)

    w_rows = w_slab.shape[0]
    b_rows = b_slab.shape[0]

    return pl.pallas_call(
        kernel,
        out_shape=jax.ShapeDtypeStruct((B, A), jnp.float32),
        grid=grid,
        in_specs=[
            # Per-step batch tile of the state.
            pl.BlockSpec((TB, S), lambda i: (i, 0)),
            # Packed params: same block every step -> VMEM resident.
            pl.BlockSpec((w_rows, COLS), lambda i: (0, 0)),
            pl.BlockSpec((b_rows, COLS), lambda i: (0, 0)),
        ],
        # Narrow (width-A) output: tiny HBM writeback, no post-kernel slice.
        out_specs=pl.BlockSpec((TB, A), lambda i: (i, 0)),
        compiler_params=pltpu.CompilerParams(
            dimension_semantics=("parallel",)),
    )(state, w_slab, b_slab)


# ---------------------------------------------------------------------------
# Init + references
# ---------------------------------------------------------------------------
def init_actor_params(key, state_dim, action_dim, hidden_size=64):
    """Mirrors nn.Linear's U(-1/sqrt(fan_in), 1/sqrt(fan_in)) init.
    Weights stored as [in_features, out_features] (transposed vs. PyTorch)."""
    def linear(k, fan_in, fan_out):
        kw, kb = jax.random.split(k)
        bound = 1.0 / jnp.sqrt(jnp.float32(fan_in))
        w = jax.random.uniform(kw, (fan_in, fan_out), jnp.float32, -bound, bound)
        b = jax.random.uniform(kb, (1, fan_out), jnp.float32, -bound, bound)
        return w, b

    k1, k2, k3 = jax.random.split(key, 3)
    w1, b1 = linear(k1, state_dim, hidden_size)
    w2, b2 = linear(k2, hidden_size, hidden_size)
    w3, b3 = linear(k3, hidden_size, action_dim)
    return {"w1": w1, "b1": b1, "w2": w2, "b2": b2, "w3": w3, "b3": b3}


def actor_reference(state, params, compute_dtype=jnp.float32):
    """Pure-JAX reference; compute_dtype mirrors the kernel's MXU operand cast."""
    def lin(x, w, b):
        return jnp.dot(x.astype(compute_dtype), w.astype(compute_dtype),
                       preferred_element_type=jnp.float32) + b
    x = jnp.maximum(lin(state, params["w1"], params["b1"]), 0.0)
    x = jnp.maximum(lin(x, params["w2"], params["b2"]), 0.0)
    return jnp.tanh(lin(x, params["w3"], params["b3"]))


if __name__ == "__main__":
    key = jax.random.PRNGKey(0)
    k_state, k_params = jax.random.split(key)

    batch = 2
    state_dim = 8
    action_dim = 4
    hidden_size = 64

    state = jax.random.normal(k_state, (batch, state_dim), jnp.float32)
    params = init_actor_params(k_params, state_dim, action_dim, hidden_size)

    # Pack ONCE per parameter update (hoisted out of the per-call path).
    w_slab, b_slab, meta = pack_actor_params(params)
    w_slab, b_slab = jax.block_until_ready((w_slab, b_slab))

    out = actor_forward(state, w_slab, b_slab, meta)
    out = jax.block_until_ready(out)

    ref_bf16 = actor_reference(state, params, jnp.bfloat16)   # same-math check
    ref_f32 = actor_reference(state, params, jnp.float32)     # sanity vs full f32

    assert out.shape == (batch, action_dim)
    assert jnp.allclose(out, ref_bf16, atol=1e-4, rtol=1e-4), "mismatch vs bf16 reference"
    assert jnp.allclose(out, ref_f32, atol=5e-2, rtol=5e-2), "mismatch vs f32 reference"

    print("KERNEL_OK")
</pallas_src>

<mosaic_0001>
module attributes {stable_mosaic.version = 11 : i64} {
  func.func @_actor_kernel(%arg0: i32, %arg1: memref<2x8xf32, #tpu.memory_space<vmem>>, %arg2: memref<272x128xbf16, #tpu.memory_space<vmem>>, %arg3: memref<24x128xf32, #tpu.memory_space<vmem>>, %arg4: memref<2x4xf32, #tpu.memory_space<vmem>>) attributes {dimension_semantics = [#tpu.dimension_semantics<parallel>], iteration_bounds = array<i64: 1>, scalar_prefetch = 0 : i64, scratch_operands = 0 : i64, tpu.core_type = #tpu.core_type<tc>, window_params = [{transform_indices = @transform_0, window_bounds = array<i64: 2, 8>}, {pipeline_mode = #tpu.pipeline_mode<synchronous>, transform_indices = @transform_1, window_bounds = array<i64: 272, 128>}, {pipeline_mode = #tpu.pipeline_mode<synchronous>, transform_indices = @transform_2, window_bounds = array<i64: 24, 128>}, {transform_indices = @transform_3, window_bounds = array<i64: 2, 4>}]} {
    %c0 = arith.constant 0 : index
    %c0_0 = arith.constant 0 : index
    %0 = vector.load %arg1[%c0, %c0_0] : memref<2x8xf32, #tpu.memory_space<vmem>>, vector<2x8xf32>
    %1 = arith.truncf %0 : vector<2x8xf32> to vector<2x8xbf16>
    %c0_1 = arith.constant 0 : index
    %c0_2 = arith.constant 0 : index
    %2 = vector.load %arg2[%c0_1, %c0_2] : memref<272x128xbf16, #tpu.memory_space<vmem>>, vector<8x128xbf16>
    %c16 = arith.constant 16 : index
    %c0_3 = arith.constant 0 : index
    %3 = vector.load %arg2[%c16, %c0_3] : memref<272x128xbf16, #tpu.memory_space<vmem>>, vector<128x128xbf16>
    %c144 = arith.constant 144 : index
    %c0_4 = arith.constant 0 : index
    %4 = vector.load %arg2[%c144, %c0_4] : memref<272x128xbf16, #tpu.memory_space<vmem>>, vector<128x128xbf16>
    %c0_5 = arith.constant 0 : index
    %c0_6 = arith.constant 0 : index
    %5 = vector.load %arg3[%c0_5, %c0_6] : memref<24x128xf32, #tpu.memory_space<vmem>>, vector<1x128xf32>
    %c8 = arith.constant 8 : index
    %c0_7 = arith.constant 0 : index
    %6 = vector.load %arg3[%c8, %c0_7] : memref<24x128xf32, #tpu.memory_space<vmem>>, vector<1x128xf32>
    %c16_8 = arith.constant 16 : index
    %c0_9 = arith.constant 0 : index
    %7 = vector.load %arg3[%c16_8, %c0_9] : memref<24x128xf32, #tpu.memory_space<vmem>>, vector<1x128xf32>
    %cst = arith.constant dense<0.000000e+00> : vector<2x128xf32>
    %8 = tpu.matmul %1, %2, %cst {dimension_numbers = #tpu.dot_dimension_numbers<[1], [0], [0], [1], [0, 0, 1, 1], [], []>} : vector<2x8xbf16>, vector<8x128xbf16>, vector<2x128xf32> -> vector<2x128xf32>
    %9 = vector.broadcast %5 : vector<1x128xf32> to vector<2x128xf32>
    %10 = arith.addf %8, %9 : vector<2x128xf32>
    %cst_10 = arith.constant 0.000000e+00 : f32
    %11 = vector.broadcast %cst_10 : f32 to vector<2x128xf32>
    %12 = arith.maximumf %10, %11 : vector<2x128xf32>
    %13 = arith.truncf %12 : vector<2x128xf32> to vector<2x128xbf16>
    %cst_11 = arith.constant dense<0.000000e+00> : vector<2x128xf32>
    %14 = tpu.matmul %13, %3, %cst_11 {dimension_numbers = #tpu.dot_dimension_numbers<[1], [0], [0], [1], [0, 0, 1, 1], [], []>} : vector<2x128xbf16>, vector<128x128xbf16>, vector<2x128xf32> -> vector<2x128xf32>
    %15 = vector.broadcast %6 : vector<1x128xf32> to vector<2x128xf32>
    %16 = arith.addf %14, %15 : vector<2x128xf32>
    %cst_12 = arith.constant 0.000000e+00 : f32
    %17 = vector.broadcast %cst_12 : f32 to vector<2x128xf32>
    %18 = arith.maximumf %16, %17 : vector<2x128xf32>
    %19 = arith.truncf %18 : vector<2x128xf32> to vector<2x128xbf16>
    %cst_13 = arith.constant dense<0.000000e+00> : vector<2x128xf32>
    %20 = tpu.matmul %19, %4, %cst_13 {dimension_numbers = #tpu.dot_dimension_numbers<[1], [0], [0], [1], [0, 0, 1, 1], [], []>} : vector<2x128xbf16>, vector<128x128xbf16>, vector<2x128xf32> -> vector<2x128xf32>
    %21 = vector.broadcast %7 : vector<1x128xf32> to vector<2x128xf32>
    %22 = arith.addf %20, %21 : vector<2x128xf32>
    %23 = math.tanh %22 : vector<2x128xf32>
    %24 = vector.extract_strided_slice %23 {offsets = [0, 0], sizes = [2, 4], strides = [1, 1]} : vector<2x128xf32> to vector<2x4xf32>
    %c0_14 = arith.constant 0 : index
    %c0_15 = arith.constant 0 : index
    %25 = vector.load %arg4[%c0_14, %c0_15] : memref<2x4xf32, #tpu.memory_space<vmem>>, vector<2x4xf32>
    tpu.vector_store %arg4[%c0_14, %c0_15], %24 {strides = array<i32>} : memref<2x4xf32, #tpu.memory_space<vmem>>, vector<2x4xf32>,
    return
  }
  func.func @transform_0(%arg0: i32) -> (i32, i32) {
    %c0_i32 = arith.constant 0 : i32
    %c0_i32_0 = arith.constant 0 : i32
    return %arg0, %c0_i32 : i32, i32
  }
  func.func @transform_1(%arg0: i32) -> (i32, i32) {
    %c0_i32 = arith.constant 0 : i32
    %c0_i32_0 = arith.constant 0 : i32
    %c0_i32_1 = arith.constant 0 : i32
    return %c0_i32, %c0_i32_0 : i32, i32
  }
  func.func @transform_2(%arg0: i32) -> (i32, i32) {
    %c0_i32 = arith.constant 0 : i32
    %c0_i32_0 = arith.constant 0 : i32
    %c0_i32_1 = arith.constant 0 : i32
    return %c0_i32, %c0_i32_0 : i32, i32
  }
  func.func @transform_3(%arg0: i32) -> (i32, i32) {
    %c0_i32 = arith.constant 0 : i32
    %c0_i32_0 = arith.constant 0 : i32
    return %arg0, %c0_i32 : i32, i32
  }
}

</mosaic_0001>

<llo_original>
// kernel: tpu_custom_call.1
$region0: #{tpu_custom_call.1}
  #allocation0 [shape = 'u32[]', space=smem, size = 0x4, offset = 0x4, fixed_abs, tag = 'smem constant byte address 0x4 - core index']
  #allocation1 [shape = 'u32[144,128]{1,0:T(1,128)}', space=vmem, size = 0x12000, scoped, tag = 'internal scratch']
  %s0 = inlined_call_operand.hbm [shape: f32[2,8], index: 0, kind: input, shape index: {}]
  %s1 = inlined_call_operand.hbm [shape: bf16[272,128], index: 1, kind: input, shape index: {}]
  %s2 = inlined_call_operand.hbm [shape: f32[24,128], index: 2, kind: input, shape index: {}]
  %s3 = inlined_call_operand.hbm [shape: f32[2,4], index: 3, kind: output, shape index: {}]
  %s4 = sld [smem:[#allocation0]]
  $region34: #{tpu_custom_call.1} parent=0
    _
  %s6 = ssub.s32 1, %s4
  %s7 = scalar_select 0, %s6, %s4
  $region1: #{tpu_custom_call.1} parent=0
    #allocation2 [shape = 'u8[1024]{0}', space=vmem, size = 0x400, scoped, tag = 'input window, operand 0, single buffered']
    #allocation3 [shape = 's32[1]{0}', space=sflag, size = 0x4, scoped, tag = 'scoped memory for tpu_custom_call.1']
    #allocation4 [shape = 's32[1]{0}', space=sflag, size = 0x4, scoped, tag = 'scoped memory for tpu_custom_call.1']
    #allocation5 [shape = 'u8[69632]{0}', space=vmem, size = 0x11000, scoped, tag = 'input window, operand 1, single buffered']
    #allocation6 [shape = 's32[1]{0}', space=sflag, size = 0x4, scoped, tag = 'scoped memory for tpu_custom_call.1']
    #allocation7 [shape = 'u8[12288]{0}', space=vmem, size = 0x3000, scoped, tag = 'input window, operand 2, single buffered']
    #allocation8 [shape = 'u8[1024]{0}', space=vmem, size = 0x400, scoped, tag = 'output window, operand 0, single buffered']
    %8 = vsyncpa [#allocation3], 0
    %9 = vsyncpa [#allocation6], 0
    %10 = vsyncpa [#allocation4], 0
    // Predicated region
    $region2: #{tpu_custom_call.1} parent=1 // pred_check
      _
    $region3: #{tpu_custom_call.1} parent=1 // pred_check_branch
      %12 = sbr.rel (0) target = $region5
    $region4: #{tpu_custom_call.1} parent=1 // pred_region
      %s14 = ssub.s32 32, 32
      %15 = vsyncadd [#allocation3], %s14
      %s17 = sshll.u32 [#allocation2], 4
      %s18 = int_to_ptr.vmem [resolvable:$true] %s17
      %20 = dma.hbm_to_vmem [thread:$0]  %s0, 32, %s18, [#allocation3]
    $region5: #{tpu_custom_call.1} parent=1 // pred_fallthru
      _
    // Predicated region
    $region6: #{tpu_custom_call.1} parent=1 // pred_check
      _
    $region7: #{tpu_custom_call.1} parent=1 // pred_check_branch
      %22 = sbr.rel (0) target = $region9
    $region8: #{tpu_custom_call.1} parent=1 // pred_region
      %s24 = ssub.s32 2176, 2176
      %25 = vsyncadd [#allocation6], %s24
      %s26 = sshll.u32 [#allocation5], 4
      %s27 = int_to_ptr.vmem [resolvable:$true] %s26
      %32 = dma.hbm_to_vmem [thread:$0]  %s1, 2176, %s27, [#allocation6], 64, 64, 4
    $region9: #{tpu_custom_call.1} parent=1 // pred_fallthru
      _
    // Predicated region
    $region10: #{tpu_custom_call.1} parent=1 // pred_check
      _
    $region11: #{tpu_custom_call.1} parent=1 // pred_check_branch
      %34 = sbr.rel (0) target = $region13
    $region12: #{tpu_custom_call.1} parent=1 // pred_region
      %s36 = ssub.s32 384, 384
      %37 = vsyncadd [#allocation6], %s36
      %s38 = sshll.u32 [#allocation7], 4
      %s39 = int_to_ptr.vmem [resolvable:$true] %s38
      %44 = dma.hbm_to_vmem [thread:$0]  %s2, 384, %s39, [#allocation6], 128, 128, 8
    $region13: #{tpu_custom_call.1} parent=1 // pred_fallthru
      _
    // Predicated region
    $region14: #{tpu_custom_call.1} parent=1 // pred_check
      _
    $region15: #{tpu_custom_call.1} parent=1 // pred_check_branch
      %46 = sbr.rel (0) target = $region17
    $region16: #{tpu_custom_call.1} parent=1 // pred_region
      %47 = dma.done [#allocation3], 32
    $region17: #{tpu_custom_call.1} parent=1 // pred_fallthru
      _
    // Predicated region
    $region18: #{tpu_custom_call.1} parent=1 // pred_check
      _
    $region19: #{tpu_custom_call.1} parent=1 // pred_check_branch
      %49 = sbr.rel (0) target = $region21
    $region20: #{tpu_custom_call.1} parent=1 // pred_region
      %50 = dma.done [#allocation6], 2176
    $region21: #{tpu_custom_call.1} parent=1 // pred_fallthru
      _
    // Predicated region
    $region22: #{tpu_custom_call.1} parent=1 // pred_check
      _
    $region23: #{tpu_custom_call.1} parent=1 // pred_check_branch
      %52 = sbr.rel (0) target = $region25
    $region24: #{tpu_custom_call.1} parent=1 // pred_region
      %53 = dma.done [#allocation6], 384
    $region25: #{tpu_custom_call.1} parent=1 // pred_fallthru
      _
    %v55 = vld [vmem:[#allocation2] sm:$0x3]
    %v56 = vpack.c.bf16 %v55, %v55
    %v57 = vld [vmem:[#allocation5] sm:$0xf]
    %v58 = vld [vmem:[#allocation5 + $0x8] sm:$0xf]
    %v59 = vld [vmem:[#allocation5 + $0xc] sm:$0xf]
    %v60 = vld [vmem:[#allocation5 + $0x10] sm:$0xf]
    %v61 = vld [vmem:[#allocation5 + $0x14] sm:$0xf]
    %v62 = vld [vmem:[#allocation5 + $0x18] sm:$0xf]
    %v63 = vld [vmem:[#allocation5 + $0x1c] sm:$0xf]
    %v64 = vld [vmem:[#allocation5 + $0x20] sm:$0xf]
    %v65 = vld [vmem:[#allocation5 + $0x24] sm:$0xf]
    %v66 = vld [vmem:[#allocation5 + $0x28] sm:$0xf]
    %v67 = vld [vmem:[#allocation5 + $0x2c] sm:$0xf]
    %v68 = vld [vmem:[#allocation5 + $0x30] sm:$0xf]
    %v69 = vld [vmem:[#allocation5 + $0x34] sm:$0xf]
    %v70 = vld [vmem:[#allocation5 + $0x38] sm:$0xf]
    %v71 = vld [vmem:[#allocation5 + $0x3c] sm:$0xf]
    %v72 = vld [vmem:[#allocation5 + $0x40] sm:$0xf]
    %v73 = vld [vmem:[#allocation5 + $0x44] sm:$0xf]
    %v74 = vld [vmem:[#allocation5 + $0x48] sm:$0xf]
    %v75 = vld [vmem:[#allocation5 + $0x4c] sm:$0xf]
    %v76 = vld [vmem:[#allocation5 + $0x50] sm:$0xf]
    %v77 = vld [vmem:[#allocation5 + $0x54] sm:$0xf]
    %v78 = vld [vmem:[#allocation5 + $0x58] sm:$0xf]
    %v79 = vld [vmem:[#allocation5 + $0x5c] sm:$0xf]
    %v80 = vld [vmem:[#allocation5 + $0x60] sm:$0xf]
    %v81 = vld [vmem:[#allocation5 + $0x64] sm:$0xf]
    %v82 = vld [vmem:[#allocation5 + $0x68] sm:$0xf]
    %v83 = vld [vmem:[#allocation5 + $0x6c] sm:$0xf]
    %v84 = vld [vmem:[#allocation5 + $0x70] sm:$0xf]
    %v85 = vld [vmem:[#allocation5 + $0x74] sm:$0xf]
    %v86 = vld [vmem:[#allocation5 + $0x78] sm:$0xf]
    %v87 = vld [vmem:[#allocation5 + $0x7c] sm:$0xf]
    %v88 = vld [vmem:[#allocation5 + $0x80] sm:$0xf]
    %v89 = vld [vmem:[#allocation5 + $0x84] sm:$0xf]
    %v90 = vld [vmem:[#allocation7] sm:$0x1]
    %v91 = vld [vmem:[#allocation7 + $0x8] sm:$0x1]
    %v92 = vld [vmem:[#allocation7 + $0x10] sm:$0x1]
    %v93 = vlaneseq
    %v94 = vshrl.u32 %v93, 7
    %v95 = vsub.s32 0, %v94
    %v96 = vrot.slane %v90, %v95
    %vm97 = vcmask 64512
    %v99 = vsel %vm97, %v56, 0
    %vm101 = vcmask 1043456
    %v103 = vsel %vm101, %v57, 0
    %105 = vmatprep.subr.bf16.mxu0 0
    %106 = vmatpush1.bf16.msra.mxu0 %v103
    %107 = vmatprep.subr.bf16.mxu0 0
    %108 = vmatpush1.bf16.msra.mxu0 0
    %109 = vmatprep.subr.bf16.mxu0 0
    %110 = vmatpush1.bf16.msra.mxu0 0
    %111 = vmatprep.subr.bf16.mxu0 0
    %112 = vmatpush1.bf16.msra.mxu0 0
    %113 = vmatprep.subr.bf16.mxu0 0
    %114 = vmatpush1.bf16.msra.mxu0 0
    %115 = vmatprep.subr.bf16.mxu0 0
    %116 = vmatpush1.bf16.msra.mxu0 0
    %117 = vmatprep.subr.bf16.mxu0 0
    %118 = vmatpush1.bf16.msra.mxu0 0
    %119 = vmatprep.subr.bf16.mxu0 0
    %120 = vmatpush1.bf16.msra.mxu0 0
    %121 = vmatprep.subr.bf16.mxu0 0
    %122 = vmatpush1.bf16.msra.mxu0 0
    %123 = vmatprep.subr.bf16.mxu0 0
    %124 = vmatpush1.bf16.msra.mxu0 0
    %125 = vmatprep.subr.bf16.mxu0 0
    %126 = vmatpush1.bf16.msra.mxu0 0
    %127 = vmatprep.subr.bf16.mxu0 0
    %128 = vmatpush1.bf16.msra.mxu0 0
    %129 = vmatprep.subr.bf16.mxu0 0
    %130 = vmatpush1.bf16.msra.mxu0 0
    %131 = vmatprep.subr.bf16.mxu0 0
    %132 = vmatpush1.bf16.msra.mxu0 0
    %133 = vmatprep.subr.bf16.mxu0 0
    %134 = vmatpush1.bf16.msra.mxu0 0
    %135 = vmatprep.subr.bf16.mxu0 0
    %136 = vmatpush1.bf16.msra.mxu0 0
    %137 = vmatprep.mubr.bf16.mxu0 0
    %138 = vmatmul.mubr.bf16.gmra.mrb[0].mxu0 %v99
    %v139 = vpop.f32.mrb[0].mxu0
    %v140 = vadd.f32 %v96, %v139
    %v141 = vpop.f32.mrb[0].mxu0
    %v142 = vpop.f32.mrb[0].mxu0
    %v143 = vpop.f32.mrb[0].mxu0
    %144 = vdwg.mxu0
    %v145 = vmax.f32 %v140, 0.0
    %v146 = vpack.c.bf16 %v145, %v145
    %v147 = vlaneseq
    %v148 = vshrl.u32 %v147, 7
    %v149 = vsub.s32 0, %v148
    %v150 = vrot.slane %v91, %v149
    %v167 = vunpack.c.l.b16 %v58
    %v168 = vunpack.c.l.b16 %v59
    %v169 = vunpack.c.l.b16 %v60
    %v170 = vunpack.c.l.b16 %v61
    %v171 = vunpack.c.l.b16 %v62
    %v172 = vunpack.c.l.b16 %v63
    %v173 = vunpack.c.l.b16 %v64
    %v174 = vunpack.c.l.b16 %v65
    %v175 = vunpack.c.l.b16 %v66
    %v176 = vunpack.c.l.b16 %v67
    %v177 = vunpack.c.l.b16 %v68
    %v178 = vunpack.c.l.b16 %v69
    %v179 = vunpack.c.l.b16 %v70
    %v180 = vunpack.c.l.b16 %v71
    %v181 = vunpack.c.l.b16 %v72
    %v182 = vunpack.c.l.b16 %v73
    %v183 = vpack.c.b16 %v168, %v167
    %v184 = vpack.c.b16 %v170, %v169
    %v185 = vpack.c.b16 %v172, %v171
    %v186 = vpack.c.b16 %v174, %v173
    %v187 = vpack.c.b16 %v176, %v175
    %v188 = vpack.c.b16 %v178, %v177
    %v189 = vpack.c.b16 %v180, %v179
    %v190 = vpack.c.b16 %v182, %v181
    %199 = vmatprep.subr.bf16.mxu0 0
    %200 = vmatpush1.bf16.msra.mxu0 %v183
    %201 = vmatprep.subr.bf16.mxu0 0
    %202 = vmatpush1.bf16.msra.mxu0 %v184
    %203 = vmatprep.subr.bf16.mxu0 0
    %204 = vmatpush1.bf16.msra.mxu0 %v185
    %205 = vmatprep.subr.bf16.mxu0 0
    %206 = vmatpush1.bf16.msra.mxu0 %v186
    %207 = vmatprep.subr.bf16.mxu0 0
    %208 = vmatpush1.bf16.msra.mxu0 %v187
    %209 = vmatprep.subr.bf16.mxu0 0
    %210 = vmatpush1.bf16.msra.mxu0 %v188
    %211 = vmatprep.subr.bf16.mxu0 0
    %212 = vmatpush1.bf16.msra.mxu0 %v189
    %213 = vmatprep.subr.bf16.mxu0 0
    %214 = vmatpush1.bf16.msra.mxu0 %v190
    %215 = vmatprep.subr.bf16.mxu0 0
    %216 = vmatpush1.bf16.msra.mxu0 0
    %217 = vmatprep.subr.bf16.mxu0 0
    %218 = vmatpush1.bf16.msra.mxu0 0
    %219 = vmatprep.subr.bf16.mxu0 0
    %220 = vmatpush1.bf16.msra.mxu0 0
    %221 = vmatprep.subr.bf16.mxu0 0
    %222 = vmatpush1.bf16.msra.mxu0 0
    %223 = vmatprep.subr.bf16.mxu0 0
    %224 = vmatpush1.bf16.msra.mxu0 0
    %225 = vmatprep.subr.bf16.mxu0 0
    %226 = vmatpush1.bf16.msra.mxu0 0
    %227 = vmatprep.subr.bf16.mxu0 0
    %228 = vmatpush1.bf16.msra.mxu0 0
    %229 = vmatprep.subr.bf16.mxu0 0
    %230 = vmatpush1.bf16.msra.mxu0 0
    %231 = vmatprep.mubr.bf16.mxu0 0
    %232 = vmatmul.mubr.bf16.gmra.mrb[0].mxu0 %v146
    %v233 = vpop.f32.mrb[0].mxu0
    %v234 = vadd.f32 %v150, %v233
    %v235 = vpop.f32.mrb[0].mxu0
    %v236 = vpop.f32.mrb[0].mxu0
    %v237 = vpop.f32.mrb[0].mxu0
    %238 = vdwg.mxu0
    %v239 = vmax.f32 %v234, 0.0
    %v240 = vpack.c.bf16 %v239, %v239
    %v241 = vlaneseq
    %v242 = vshrl.u32 %v241, 7
    %v243 = vsub.s32 0, %v242
    %v244 = vrot.slane %v92, %v243
    %v261 = vunpack.c.l.b16 %v74
    %v262 = vunpack.c.l.b16 %v75
    %v263 = vunpack.c.l.b16 %v76
    %v264 = vunpack.c.l.b16 %v77
    %v265 = vunpack.c.l.b16 %v78
    %v266 = vunpack.c.l.b16 %v79
    %v267 = vunpack.c.l.b16 %v80
    %v268 = vunpack.c.l.b16 %v81
    %v269 = vunpack.c.l.b16 %v82
    %v270 = vunpack.c.l.b16 %v83
    %v271 = vunpack.c.l.b16 %v84
    %v272 = vunpack.c.l.b16 %v85
    %v273 = vunpack.c.l.b16 %v86
    %v274 = vunpack.c.l.b16 %v87
    %v275 = vunpack.c.l.b16 %v88
    %v276 = vunpack.c.l.b16 %v89
    %v277 = vpack.c.b16 %v262, %v261
    %v278 = vpack.c.b16 %v264, %v263
    %v279 = vpack.c.b16 %v266, %v265
    %v280 = vpack.c.b16 %v268, %v267
    %v281 = vpack.c.b16 %v270, %v269
    %v282 = vpack.c.b16 %v272, %v271
    %v283 = vpack.c.b16 %v274, %v273
    %v284 = vpack.c.b16 %v276, %v275
    %293 = vmatprep.subr.bf16.mxu0 0
    %294 = vmatpush1.bf16.msra.mxu0 %v277
    %295 = vmatprep.subr.bf16.mxu0 0
    %296 = vmatpush1.bf16.msra.mxu0 %v278
    %297 = vmatprep.subr.bf16.mxu0 0
    %298 = vmatpush1.bf16.msra.mxu0 %v279
    %299 = vmatprep.subr.bf16.mxu0 0
    %300 = vmatpush1.bf16.msra.mxu0 %v280
    %301 = vmatprep.subr.bf16.mxu0 0
    %302 = vmatpush1.bf16.msra.mxu0 %v281
    %303 = vmatprep.subr.bf16.mxu0 0
    %304 = vmatpush1.bf16.msra.mxu0 %v282
    %305 = vmatprep.subr.bf16.mxu0 0
    %306 = vmatpush1.bf16.msra.mxu0 %v283
    %307 = vmatprep.subr.bf16.mxu0 0
    %308 = vmatpush1.bf16.msra.mxu0 %v284
    %309 = vmatprep.subr.bf16.mxu0 0
    %310 = vmatpush1.bf16.msra.mxu0 0
    %311 = vmatprep.subr.bf16.mxu0 0
    %312 = vmatpush1.bf16.msra.mxu0 0
    %313 = vmatprep.subr.bf16.mxu0 0
    %314 = vmatpush1.bf16.msra.mxu0 0
    %315 = vmatprep.subr.bf16.mxu0 0
    %316 = vmatpush1.bf16.msra.mxu0 0
    %317 = vmatprep.subr.bf16.mxu0 0
    %318 = vmatpush1.bf16.msra.mxu0 0
    %319 = vmatprep.subr.bf16.mxu0 0
    %320 = vmatpush1.bf16.msra.mxu0 0
    %321 = vmatprep.subr.bf16.mxu0 0
    %322 = vmatpush1.bf16.msra.mxu0 0
    %323 = vmatprep.subr.bf16.mxu0 0
    %324 = vmatpush1.bf16.msra.mxu0 0
    %325 = vmatprep.mubr.bf16.mxu0 0
    %326 = vmatmul.mubr.bf16.gmra.mrb[0].mxu0 %v240
    %v327 = vpop.f32.mrb[0].mxu0
    %v328 = vadd.f32 %v244, %v327
    %v329 = vpop.f32.mrb[0].mxu0
    %v330 = vpop.f32.mrb[0].mxu0
    %v331 = vpop.f32.mrb[0].mxu0
    %332 = vdwg.mxu0
    %v333 = vtanh.pop %v328
    %vm334 = vcmask 25600
    %335 = vst.msk [vmem:[#allocation8] sm:$0x3] %vm334, %v333
    // Predicated region
    $region26: #{tpu_custom_call.1} parent=1 // pred_check
      _
    $region27: #{tpu_custom_call.1} parent=1 // pred_check_branch
      %337 = sbr.rel (0) target = $region29
    $region28: #{tpu_custom_call.1} parent=1 // pred_region
      %s339 = ssub.s32 32, 32
      %340 = vsyncadd [#allocation4], %s339
      %s342 = sshll.u32 [#allocation8], 4
      %s343 = int_to_ptr.vmem [resolvable:$true] %s342
      %345 = dma.vmem_to_hbm [thread:$0]  %s343, 32, %s3, [#allocation4]
    $region29: #{tpu_custom_call.1} parent=1 // pred_fallthru
      _
    // Predicated region
    $region30: #{tpu_custom_call.1} parent=1 // pred_check
      _
    $region31: #{tpu_custom_call.1} parent=1 // pred_check_branch
      %347 = sbr.rel (0) target = $region33
    $region32: #{tpu_custom_call.1} parent=1 // pred_region
      %348 = dma.done [#allocation4], 32
    $region33: #{tpu_custom_call.1} parent=1 // pred_fallthru
      _
    %349 = vsyncpa [#allocation3], 1
    %350 = vsyncpa [#allocation6], 1
    %351 = vsyncpa [#allocation4], 1

</llo_original>
